<compile_context>
chip_gen: v5e
topology: v5e:2x2
jax: 0.10.0
libtpu: 0.0.40
codegen_flags: <defaults>
</compile_context>

<pallas_src>
import functools

import jax
import jax.numpy as jnp
from jax.experimental import pallas as pl
from jax.experimental.pallas import tpu as pltpu

_HIDDEN = 128


def _mlp_kernel(x_ref, w1_ref, b1_ref, w2_ref, b2_ref, w3_ref, b3_ref, o_ref,
                *, bf16_relu, cast_x):
    # Whole-tile, layer-wise computation: each weight matrix is pushed to the
    # MXU once per tile.  Intermediates (a few hundred KiB per tile) live in
    # compiler-managed VMEM.
    x = x_ref[...]
    if cast_x:
        x = x.astype(jnp.bfloat16)          # bf16 layer 1 only when in_dim is large

    h1 = jnp.dot(x, w1_ref[...], preferred_element_type=jnp.float32) + b1_ref[...]
    if bf16_relu:
        # v6e/v7x: cast first, bf16 max (half the VALU vregs; bit-identical).
        h1 = jnp.maximum(h1.astype(jnp.bfloat16), 0.0)
    else:
        # v5e: no bf16 VALU — keep f32 max, then cast for the MXU.
        h1 = jnp.maximum(h1, 0.0).astype(jnp.bfloat16)

    h2 = jnp.dot(h1, w2_ref[...], preferred_element_type=jnp.float32) + b2_ref[...]
    if bf16_relu:
        h2 = jnp.maximum(h2.astype(jnp.bfloat16), 0.0)
    else:
        h2 = jnp.maximum(h2, 0.0).astype(jnp.bfloat16)

    y = jnp.dot(h2, w3_ref[...], preferred_element_type=jnp.float32) + b3_ref[...]
    o_ref[...] = (jnp.tanh(y) * 5.0).astype(o_ref.dtype)


def _fused_reference(x, p):
    """Plain XLA path (also used as the small-batch fallback and f32 reference)."""
    h1 = jnp.maximum(x @ p["w1"] + p["b1"], 0.0)
    h2 = jnp.maximum(h1 @ p["w2"] + p["b2"], 0.0)
    return jnp.tanh(h2 @ p["w3"] + p["b3"]) * 5.0


def _device_kind():
    try:
        return jax.devices()[0].device_kind.lower()
    except Exception:
        return ""


def _num_tensorcores(kind):
    # v7x exposes 2 TensorCores per chip; v5e/v6e expose 1.
    return 2 if "v7" in kind else 1


def _pick_batch_tile(B, block_b, num_tc):
    """Batch tile: big enough to amortize grid-step overhead.  Only force a
    2-step grid (for cross-TC sharding) on chips with 2 TensorCores; on
    single-TC chips the grid is a serial loop, so extra steps are overhead."""
    if B <= block_b:
        if num_tc >= 2 and B >= 256 and B % 256 == 0:
            return B // 2          # multiple of 128, 2 grid steps for 2 TCs
        return B                   # single full-batch tile
    return block_b                 # B > block_b -> >= 2 grid steps


@functools.partial(jax.jit, static_argnames=("block_b", "use_pallas"))
def policy_network_forward(x, params, block_b=2048, use_pallas=None):
    """x: (B, input_dim) float32. params: dict of w1,b1,w2,b2,w3,b3."""
    B, in_dim = x.shape
    hidden = params["w1"].shape[1]
    out_dim = params["w3"].shape[1]

    if use_pallas is None:
        use_pallas = B > 64
    if not use_pallas:
        # Launch + DMA setup dominate for tiny batches; XLA's fused path wins.
        return _fused_reference(x, params)

    kind = _device_kind()
    num_tc = _num_tensorcores(kind)
    bf16_relu = ("v6" in kind) or ("v7" in kind)   # v5e keeps f32 ReLU order
    cast_x = in_dim >= 256                          # keep layer 1 in f32 when tiny

    tb = _pick_batch_tile(B, block_b, num_tc)
    grid = (pl.cdiv(B, tb),)

    # bf16 weights for the MXU (w1 stays f32 when layer 1 is kept in f32);
    # biases as f32 (1, N) rows (clean 2-D VMEM tiles).
    w1 = params["w1"].astype(jnp.bfloat16) if cast_x else params["w1"].astype(jnp.float32)
    w2 = params["w2"].astype(jnp.bfloat16)
    w3 = params["w3"].astype(jnp.bfloat16)
    b1 = params["b1"].reshape(1, hidden).astype(jnp.float32)
    b2 = params["b2"].reshape(1, hidden).astype(jnp.float32)
    b3 = params["b3"].reshape(1, out_dim).astype(jnp.float32)

    # Weights/biases: constant index_map -> grid-invariant residents, fetched
    # once by the pipeline (no per-step re-DMA).
    rep2 = lambda shape: pl.BlockSpec(shape, lambda i: (0, 0))

    # Deep input pipeline only when the per-tile x DMA is significant.
    if in_dim >= 512:
        x_spec = pl.BlockSpec((tb, in_dim), lambda i: (i, 0),
                              pipeline_mode=pl.Buffered(3))
    else:
        x_spec = pl.BlockSpec((tb, in_dim), lambda i: (i, 0))

    # --- explicit VMEM budget (covers v5e's 16 MiB scoped default) ----------
    w1_bpe = 2 if cast_x else 4
    weight_bytes = (in_dim * hidden * w1_bpe
                    + hidden * hidden * 2 + hidden * out_dim * 2
                    + 4 * (2 * hidden + out_dim))
    tile_io_bytes = 2 * tb * (in_dim + out_dim) * 4          # double-buffered x/out
    interm_bytes = tb * (2 * in_dim + 12 * hidden + 12 * out_dim)  # generous temps
    est = 2 * weight_bytes + tile_io_bytes + interm_bytes
    vmem_limit = int(min(max(2 * est, 16 * 1024 * 1024), 48 * 1024 * 1024))

    flops = 2 * B * (in_dim * hidden + hidden * hidden + hidden * out_dim)
    bytes_accessed = (
        B * in_dim * x.dtype.itemsize            # x read
        + B * out_dim * x.dtype.itemsize         # output write
        + weight_bytes                           # weights + biases
    )
    cost = pl.CostEstimate(
        flops=flops,
        transcendentals=B * out_dim,             # tanh
        bytes_accessed=bytes_accessed,
    )

    kernel = functools.partial(_mlp_kernel, bf16_relu=bf16_relu, cast_x=cast_x)

    return pl.pallas_call(
        kernel,
        out_shape=jax.ShapeDtypeStruct((B, out_dim), x.dtype),
        grid_spec=pltpu.PrefetchScalarGridSpec(
            num_scalar_prefetch=0,
            grid=grid,
            in_specs=[
                x_spec,                                          # x tile
                rep2((in_dim, hidden)),                          # w1
                rep2((1, hidden)),                               # b1
                rep2((hidden, hidden)),                          # w2 (bf16)
                rep2((1, hidden)),                               # b2
                rep2((hidden, out_dim)),                         # w3 (bf16)
                rep2((1, out_dim)),                              # b3
            ],
            out_specs=pl.BlockSpec((tb, out_dim), lambda i: (i, 0)),
        ),
        compiler_params=pltpu.CompilerParams(
            dimension_semantics=("parallel",),
            vmem_limit_bytes=vmem_limit,
        ),
        cost_estimate=cost,
    )(x, w1, b1, w2, b2, w3, b3)


def init_params(key, input_dim, output_dim, hidden=_HIDDEN):
    """Deterministic init matching nn.Linear's U(-1/sqrt(fan_in), 1/sqrt(fan_in))."""
    ks = jax.random.split(key, 6)

    def lin(kw, kb, fan_in, fan_out):
        bound = 1.0 / jnp.sqrt(fan_in)
        w = jax.random.uniform(kw, (fan_in, fan_out), jnp.float32, -bound, bound)
        b = jax.random.uniform(kb, (fan_out,), jnp.float32, -bound, bound)
        return w, b

    w1, b1 = lin(ks[0], ks[1], input_dim, hidden)
    w2, b2 = lin(ks[2], ks[3], hidden, hidden)
    w3, b3 = lin(ks[4], ks[5], hidden, output_dim)
    return {"w1": w1, "b1": b1, "w2": w2, "b2": b2, "w3": w3, "b3": b3}


if __name__ == "__main__":
    key = jax.random.PRNGKey(0)
    k_x, k_p = jax.random.split(key)

    batch, input_dim, output_dim = 8, 16, 8
    x = jax.random.normal(k_x, (batch, input_dim), dtype=jnp.float32)
    params = init_params(k_p, input_dim, output_dim)

    # Force the Pallas path so the kernel itself is exercised even at B=8.
    out = policy_network_forward(x, params, use_pallas=True)
    out = jax.block_until_ready(out)

    ref = _fused_reference(x, params)  # full-f32 reference
    assert out.shape == (batch, output_dim), out.shape
    # Layers 2/3 use bf16 weights/activations vs the f32 reference: loosen
    # tolerance (tanh-bounded output); layer 1 stays f32 at this in_dim.
    assert jnp.allclose(out, ref, atol=7.5e-2, rtol=5e-2), "mismatch vs reference"
    assert bool(jnp.all(jnp.abs(out) <= 5.0 + 1e-3)), "output exceeds tanh*5 bound"

    print("KERNEL_OK")
</pallas_src>

<mosaic_0001>
module attributes {stable_mosaic.version = 11 : i64} {
  func.func @_mlp_kernel(%arg0: i32, %arg1: memref<8x16xf32, #tpu.memory_space<vmem>>, %arg2: memref<16x128xf32, #tpu.memory_space<vmem>>, %arg3: memref<1x128xf32, #tpu.memory_space<vmem>>, %arg4: memref<128x128xbf16, #tpu.memory_space<vmem>>, %arg5: memref<1x128xf32, #tpu.memory_space<vmem>>, %arg6: memref<128x8xbf16, #tpu.memory_space<vmem>>, %arg7: memref<1x8xf32, #tpu.memory_space<vmem>>, %arg8: memref<8x8xf32, #tpu.memory_space<vmem>>) attributes {dimension_semantics = [#tpu.dimension_semantics<parallel>], iteration_bounds = array<i64: 1>, scalar_prefetch = 0 : i64, scratch_operands = 0 : i64, tpu.core_type = #tpu.core_type<tc>, window_params = [{transform_indices = @transform_0, window_bounds = array<i64: 8, 16>}, {pipeline_mode = #tpu.pipeline_mode<synchronous>, transform_indices = @transform_1, window_bounds = array<i64: 16, 128>}, {pipeline_mode = #tpu.pipeline_mode<synchronous>, transform_indices = @transform_2, window_bounds = array<i64: 1, 128>}, {pipeline_mode = #tpu.pipeline_mode<synchronous>, transform_indices = @transform_3, window_bounds = array<i64: 128, 128>}, {pipeline_mode = #tpu.pipeline_mode<synchronous>, transform_indices = @transform_4, window_bounds = array<i64: 1, 128>}, {pipeline_mode = #tpu.pipeline_mode<synchronous>, transform_indices = @transform_5, window_bounds = array<i64: 128, 8>}, {pipeline_mode = #tpu.pipeline_mode<synchronous>, transform_indices = @transform_6, window_bounds = array<i64: 1, 8>}, {transform_indices = @transform_7, window_bounds = array<i64: 8, 8>}]} {
    %c0 = arith.constant 0 : index
    %c0_0 = arith.constant 0 : index
    %0 = vector.load %arg1[%c0, %c0_0] : memref<8x16xf32, #tpu.memory_space<vmem>>, vector<8x16xf32>
    %c0_1 = arith.constant 0 : index
    %c0_2 = arith.constant 0 : index
    %1 = vector.load %arg2[%c0_1, %c0_2] : memref<16x128xf32, #tpu.memory_space<vmem>>, vector<16x128xf32>
    %cst = arith.constant dense<0.000000e+00> : vector<8x128xf32>
    %2 = tpu.matmul %0, %1, %cst {dimension_numbers = #tpu.dot_dimension_numbers<[1], [0], [0], [1], [0, 0, 1, 1], [], []>} : vector<8x16xf32>, vector<16x128xf32>, vector<8x128xf32> -> vector<8x128xf32>
    %c0_3 = arith.constant 0 : index
    %c0_4 = arith.constant 0 : index
    %3 = vector.load %arg3[%c0_3, %c0_4] : memref<1x128xf32, #tpu.memory_space<vmem>>, vector<1x128xf32>
    %4 = vector.broadcast %3 : vector<1x128xf32> to vector<8x128xf32>
    %5 = arith.addf %2, %4 : vector<8x128xf32>
    %cst_5 = arith.constant 0.000000e+00 : f32
    %6 = vector.broadcast %cst_5 : f32 to vector<8x128xf32>
    %7 = arith.maximumf %5, %6 : vector<8x128xf32>
    %8 = arith.truncf %7 : vector<8x128xf32> to vector<8x128xbf16>
    %c0_6 = arith.constant 0 : index
    %c0_7 = arith.constant 0 : index
    %9 = vector.load %arg4[%c0_6, %c0_7] : memref<128x128xbf16, #tpu.memory_space<vmem>>, vector<128x128xbf16>
    %cst_8 = arith.constant dense<0.000000e+00> : vector<8x128xf32>
    %10 = tpu.matmul %8, %9, %cst_8 {dimension_numbers = #tpu.dot_dimension_numbers<[1], [0], [0], [1], [0, 0, 1, 1], [], []>} : vector<8x128xbf16>, vector<128x128xbf16>, vector<8x128xf32> -> vector<8x128xf32>
    %c0_9 = arith.constant 0 : index
    %c0_10 = arith.constant 0 : index
    %11 = vector.load %arg5[%c0_9, %c0_10] : memref<1x128xf32, #tpu.memory_space<vmem>>, vector<1x128xf32>
    %12 = vector.broadcast %11 : vector<1x128xf32> to vector<8x128xf32>
    %13 = arith.addf %10, %12 : vector<8x128xf32>
    %cst_11 = arith.constant 0.000000e+00 : f32
    %14 = vector.broadcast %cst_11 : f32 to vector<8x128xf32>
    %15 = arith.maximumf %13, %14 : vector<8x128xf32>
    %16 = arith.truncf %15 : vector<8x128xf32> to vector<8x128xbf16>
    %c0_12 = arith.constant 0 : index
    %c0_13 = arith.constant 0 : index
    %17 = vector.load %arg6[%c0_12, %c0_13] : memref<128x8xbf16, #tpu.memory_space<vmem>>, vector<128x8xbf16>
    %cst_14 = arith.constant dense<0.000000e+00> : vector<8x8xf32>
    %18 = tpu.matmul %16, %17, %cst_14 {dimension_numbers = #tpu.dot_dimension_numbers<[1], [0], [0], [1], [0, 0, 1, 1], [], []>} : vector<8x128xbf16>, vector<128x8xbf16>, vector<8x8xf32> -> vector<8x8xf32>
    %c0_15 = arith.constant 0 : index
    %c0_16 = arith.constant 0 : index
    %19 = vector.load %arg7[%c0_15, %c0_16] : memref<1x8xf32, #tpu.memory_space<vmem>>, vector<1x8xf32>
    %20 = vector.broadcast %19 : vector<1x8xf32> to vector<8x8xf32>
    %21 = arith.addf %18, %20 : vector<8x8xf32>
    %22 = math.tanh %21 : vector<8x8xf32>
    %cst_17 = arith.constant 5.000000e+00 : f32
    %23 = vector.broadcast %cst_17 : f32 to vector<8x8xf32>
    %24 = arith.mulf %22, %23 : vector<8x8xf32>
    %c0_18 = arith.constant 0 : index
    %c0_19 = arith.constant 0 : index
    %25 = vector.load %arg8[%c0_18, %c0_19] : memref<8x8xf32, #tpu.memory_space<vmem>>, vector<8x8xf32>
    tpu.vector_store %arg8[%c0_18, %c0_19], %24 {strides = array<i32>} : memref<8x8xf32, #tpu.memory_space<vmem>>, vector<8x8xf32>,
    return
  }
  func.func @transform_0(%arg0: i32) -> (i32, i32) {
    %c0_i32 = arith.constant 0 : i32
    %c0_i32_0 = arith.constant 0 : i32
    return %arg0, %c0_i32 : i32, i32
  }
  func.func @transform_1(%arg0: i32) -> (i32, i32) {
    %c0_i32 = arith.constant 0 : i32
    %c0_i32_0 = arith.constant 0 : i32
    %c0_i32_1 = arith.constant 0 : i32
    return %c0_i32, %c0_i32_0 : i32, i32
  }
  func.func @transform_2(%arg0: i32) -> (i32, i32) {
    %c0_i32 = arith.constant 0 : i32
    %c0_i32_0 = arith.constant 0 : i32
    %c0_i32_1 = arith.constant 0 : i32
    return %c0_i32, %c0_i32_0 : i32, i32
  }
  func.func @transform_3(%arg0: i32) -> (i32, i32) {
    %c0_i32 = arith.constant 0 : i32
    %c0_i32_0 = arith.constant 0 : i32
    %c0_i32_1 = arith.constant 0 : i32
    return %c0_i32, %c0_i32_0 : i32, i32
  }
  func.func @transform_4(%arg0: i32) -> (i32, i32) {
    %c0_i32 = arith.constant 0 : i32
    %c0_i32_0 = arith.constant 0 : i32
    %c0_i32_1 = arith.constant 0 : i32
    return %c0_i32, %c0_i32_0 : i32, i32
  }
  func.func @transform_5(%arg0: i32) -> (i32, i32) {
    %c0_i32 = arith.constant 0 : i32
    %c0_i32_0 = arith.constant 0 : i32
    %c0_i32_1 = arith.constant 0 : i32
    return %c0_i32, %c0_i32_0 : i32, i32
  }
  func.func @transform_6(%arg0: i32) -> (i32, i32) {
    %c0_i32 = arith.constant 0 : i32
    %c0_i32_0 = arith.constant 0 : i32
    %c0_i32_1 = arith.constant 0 : i32
    return %c0_i32, %c0_i32_0 : i32, i32
  }
  func.func @transform_7(%arg0: i32) -> (i32, i32) {
    %c0_i32 = arith.constant 0 : i32
    %c0_i32_0 = arith.constant 0 : i32
    return %arg0, %c0_i32 : i32, i32
  }
}

</mosaic_0001>

<llo_original>
// kernel: policy_network_forward.1
$region0: #{policy_network_forward.1}
  #allocation0 [shape = 'u32[]', space=smem, size = 0x4, offset = 0x4, fixed_abs, tag = 'smem constant byte address 0x4 - core index']
  #allocation1 [shape = 'u32[72,128]{1,0:T(1,128)}', space=vmem, size = 0x9000, scoped, tag = 'internal scratch']
  %s0 = inlined_call_operand.vmem [shape: f32[8,16], index: 0, kind: input, shape index: {}]
  %s1 = inlined_call_operand.vmem [shape: f32[16,128], index: 1, kind: input, shape index: {}]
  %s2 = inlined_call_operand.vmem [shape: f32[1,128], index: 2, kind: input, shape index: {}]
  %s3 = inlined_call_operand.vmem [shape: bf16[128,128], index: 3, kind: input, shape index: {}]
  %s4 = inlined_call_operand.vmem [shape: f32[1,128], index: 4, kind: input, shape index: {}]
  %s5 = inlined_call_operand.vmem [shape: bf16[128,8], index: 5, kind: input, shape index: {}]
  %s6 = inlined_call_operand.vmem [shape: f32[1,8], index: 6, kind: input, shape index: {}]
  %s7 = inlined_call_operand.hbm [shape: f32[8,8], index: 7, kind: output, shape index: {}]
  %s8 = sld [smem:[#allocation0]]
  $region38: #{policy_network_forward.1} parent=0
    _
  %s10 = ssub.s32 1, %s8
  %s11 = scalar_select 0, %s10, %s8
  $region1: #{policy_network_forward.1} parent=0
    #allocation2 [shape = 'u8[4096]{0}', space=vmem, size = 0x1000, scoped, tag = 'output window, operand 0, single buffered']
    #allocation3 [shape = 's32[1]{0}', space=sflag, size = 0x4, scoped, tag = 'scoped memory for policy_network_forward.1']
    %12 = vsyncpa [#allocation3], 0
    // Predicated region
    $region2: #{policy_network_forward.1} parent=1 // pred_check
      _
    $region3: #{policy_network_forward.1} parent=1 // pred_check_branch
      %14 = sbr.rel (0) target = $region5
    $region4: #{policy_network_forward.1} parent=1 // pred_region
      _
    $region5: #{policy_network_forward.1} parent=1 // pred_fallthru
      _
    // Predicated region
    $region6: #{policy_network_forward.1} parent=1 // pred_check
      _
    $region7: #{policy_network_forward.1} parent=1 // pred_check_branch
      %16 = sbr.rel (0) target = $region9
    $region8: #{policy_network_forward.1} parent=1 // pred_region
      _
    $region9: #{policy_network_forward.1} parent=1 // pred_fallthru
      _
    // Predicated region
    $region10: #{policy_network_forward.1} parent=1 // pred_check
      _
    $region11: #{policy_network_forward.1} parent=1 // pred_check_branch
      %18 = sbr.rel (0) target = $region13
    $region12: #{policy_network_forward.1} parent=1 // pred_region
      _
    $region13: #{policy_network_forward.1} parent=1 // pred_fallthru
      _
    // Predicated region
    $region14: #{policy_network_forward.1} parent=1 // pred_check
      _
    $region15: #{policy_network_forward.1} parent=1 // pred_check_branch
      %20 = sbr.rel (0) target = $region17
    $region16: #{policy_network_forward.1} parent=1 // pred_region
      _
    $region17: #{policy_network_forward.1} parent=1 // pred_fallthru
      _
    // Predicated region
    $region18: #{policy_network_forward.1} parent=1 // pred_check
      _
    $region19: #{policy_network_forward.1} parent=1 // pred_check_branch
      %22 = sbr.rel (0) target = $region21
    $region20: #{policy_network_forward.1} parent=1 // pred_region
      _
    $region21: #{policy_network_forward.1} parent=1 // pred_fallthru
      _
    // Predicated region
    $region22: #{policy_network_forward.1} parent=1 // pred_check
      _
    $region23: #{policy_network_forward.1} parent=1 // pred_check_branch
      %24 = sbr.rel (0) target = $region25
    $region24: #{policy_network_forward.1} parent=1 // pred_region
      _
    $region25: #{policy_network_forward.1} parent=1 // pred_fallthru
      _
    // Predicated region
    $region26: #{policy_network_forward.1} parent=1 // pred_check
      _
    $region27: #{policy_network_forward.1} parent=1 // pred_check_branch
      %26 = sbr.rel (0) target = $region29
    $region28: #{policy_network_forward.1} parent=1 // pred_region
      _
    $region29: #{policy_network_forward.1} parent=1 // pred_fallthru
      _
    %v27 = vld [vmem:[%s0] sm:$0xff]
    %v28 = vld [vmem:[%s1] sm:$0xff]
    %v29 = vld [vmem:[%s1 + $0x8] sm:$0xff]
    %v30 = vld [vmem:[%s2] sm:$0x1]
    %v32 = vperm.slane %v30, 0
    %vm34 = vcmask 130048
    %v36 = vsel %vm34, %v27, 0
    %38 = vmatpush.msra.mxu0 0.0
    %39 = vmatpush.msra.mxu0 0.0
    %40 = vmatpush.msra.mxu0 0.0
    %41 = vmatpush.msra.mxu0 0.0
    %42 = vmatpush.msra.mxu0 0.0
    %43 = vmatpush.msra.mxu0 0.0
    %44 = vmatpush.msra.mxu0 0.0
    %45 = vmatpush.msra.mxu0 0.0
    %46 = vmatpush.msra.mxu0 0.0
    %47 = vmatpush.msra.mxu0 0.0
    %48 = vmatpush.msra.mxu0 0.0
    %49 = vmatpush.msra.mxu0 0.0
    %50 = vmatpush.msra.mxu0 0.0
    %51 = vmatpush.msra.mxu0 0.0
    %52 = vmatpush.msra.mxu0 %v29
    %53 = vmatpush.msra.mxu0 %v28
    %54 = vmatmul.f32.gmra.mxu0 %v36
    %v55 = vpop.f32.mrf.mxu0
    %v56 = vadd.f32 %v32, %v55
    %57 = vdwg.mxu0
    %v58 = vmax.f32 %v56, 0.0
    %v59 = vpack.c.bf16 %v58, %v58
    %v60 = vld [vmem:[%s3] sm:$0xf]
    %v61 = vld [vmem:[%s3 + $0x4] sm:$0xf]
    %v62 = vld [vmem:[%s3 + $0x8] sm:$0xf]
    %v63 = vld [vmem:[%s3 + $0xc] sm:$0xf]
    %v64 = vld [vmem:[%s3 + $0x10] sm:$0xf]
    %v65 = vld [vmem:[%s3 + $0x14] sm:$0xf]
    %v66 = vld [vmem:[%s3 + $0x18] sm:$0xf]
    %v67 = vld [vmem:[%s3 + $0x1c] sm:$0xf]
    %v68 = vld [vmem:[%s3 + $0x20] sm:$0xf]
    %v69 = vld [vmem:[%s3 + $0x24] sm:$0xf]
    %v70 = vld [vmem:[%s3 + $0x28] sm:$0xf]
    %v71 = vld [vmem:[%s3 + $0x2c] sm:$0xf]
    %v72 = vld [vmem:[%s3 + $0x30] sm:$0xf]
    %v73 = vld [vmem:[%s3 + $0x34] sm:$0xf]
    %v74 = vld [vmem:[%s3 + $0x38] sm:$0xf]
    %v75 = vld [vmem:[%s3 + $0x3c] sm:$0xf]
    %v76 = vld [vmem:[%s4] sm:$0x1]
    %v78 = vperm.slane %v76, 0
    %v96 = vunpack.c.l.b16 %v60
    %v97 = vunpack.c.l.b16 %v61
    %v98 = vunpack.c.l.b16 %v62
    %v99 = vunpack.c.l.b16 %v63
    %v100 = vunpack.c.l.b16 %v64
    %v101 = vunpack.c.l.b16 %v65
    %v102 = vunpack.c.l.b16 %v66
    %v103 = vunpack.c.l.b16 %v67
    %v104 = vunpack.c.l.b16 %v68
    %v105 = vunpack.c.l.b16 %v69
    %v106 = vunpack.c.l.b16 %v70
    %v107 = vunpack.c.l.b16 %v71
    %v108 = vunpack.c.l.b16 %v72
    %v109 = vunpack.c.l.b16 %v73
    %v110 = vunpack.c.l.b16 %v74
    %v111 = vunpack.c.l.b16 %v75
    %v112 = vpack.c.b16 %v97, %v96
    %v113 = vpack.c.b16 %v99, %v98
    %v114 = vpack.c.b16 %v101, %v100
    %v115 = vpack.c.b16 %v103, %v102
    %v116 = vpack.c.b16 %v105, %v104
    %v117 = vpack.c.b16 %v107, %v106
    %v118 = vpack.c.b16 %v109, %v108
    %v119 = vpack.c.b16 %v111, %v110
    %128 = vmatpush.bf16.msra.mxu0 %v119
    %129 = vmatpush.bf16.msra.mxu0 %v118
    %130 = vmatpush.bf16.msra.mxu0 %v117
    %131 = vmatpush.bf16.msra.mxu0 %v116
    %132 = vmatpush.bf16.msra.mxu0 %v115
    %133 = vmatpush.bf16.msra.mxu0 %v114
    %134 = vmatpush.bf16.msra.mxu0 %v113
    %135 = vmatpush.bf16.msra.mxu0 %v112
    %136 = vmatmul.bf16.gmra.mxu0 %v59
    %v137 = vpop.f32.mrf.mxu0
    %v138 = vadd.f32 %v78, %v137
    %v139 = vpop.f32.mrf.mxu0
    %140 = vdwg.mxu0
    %v141 = vmax.f32 %v138, 0.0
    %v142 = vpack.c.bf16 %v141, %v141
    %v143 = vld [vmem:[%s5] sm:$0xf]
    %v144 = vld [vmem:[%s5 + $0x4] sm:$0xf]
    %v145 = vld [vmem:[%s5 + $0x8] sm:$0xf]
    %v146 = vld [vmem:[%s5 + $0xc] sm:$0xf]
    %v147 = vld [vmem:[%s5 + $0x10] sm:$0xf]
    %v148 = vld [vmem:[%s5 + $0x14] sm:$0xf]
    %v149 = vld [vmem:[%s5 + $0x18] sm:$0xf]
    %v150 = vld [vmem:[%s5 + $0x1c] sm:$0xf]
    %v151 = vld [vmem:[%s5 + $0x20] sm:$0xf]
    %v152 = vld [vmem:[%s5 + $0x24] sm:$0xf]
    %v153 = vld [vmem:[%s5 + $0x28] sm:$0xf]
    %v154 = vld [vmem:[%s5 + $0x2c] sm:$0xf]
    %v155 = vld [vmem:[%s5 + $0x30] sm:$0xf]
    %v156 = vld [vmem:[%s5 + $0x34] sm:$0xf]
    %v157 = vld [vmem:[%s5 + $0x38] sm:$0xf]
    %v158 = vld [vmem:[%s5 + $0x3c] sm:$0xf]
    %v159 = vld [vmem:[%s6] sm:$0x1]
    %v161 = vperm.slane %v159, 0
    %v179 = vunpack.c.l.b16 %v143
    %v180 = vunpack.c.l.b16 %v144
    %v181 = vunpack.c.l.b16 %v145
    %v182 = vunpack.c.l.b16 %v146
    %v183 = vunpack.c.l.b16 %v147
    %v184 = vunpack.c.l.b16 %v148
    %v185 = vunpack.c.l.b16 %v149
    %v186 = vunpack.c.l.b16 %v150
    %v187 = vunpack.c.l.b16 %v151
    %v188 = vunpack.c.l.b16 %v152
    %v189 = vunpack.c.l.b16 %v153
    %v190 = vunpack.c.l.b16 %v154
    %v191 = vunpack.c.l.b16 %v155
    %v192 = vunpack.c.l.b16 %v156
    %v193 = vunpack.c.l.b16 %v157
    %v194 = vunpack.c.l.b16 %v158
    %v195 = vpack.c.b16 %v180, %v179
    %v196 = vpack.c.b16 %v182, %v181
    %v197 = vpack.c.b16 %v184, %v183
    %v198 = vpack.c.b16 %v186, %v185
    %v199 = vpack.c.b16 %v188, %v187
    %v200 = vpack.c.b16 %v190, %v189
    %v201 = vpack.c.b16 %v192, %v191
    %v202 = vpack.c.b16 %v194, %v193
    %211 = vmatpush.bf16.msra.mxu0 %v202
    %212 = vmatpush.bf16.msra.mxu0 %v201
    %213 = vmatpush.bf16.msra.mxu0 %v200
    %214 = vmatpush.bf16.msra.mxu0 %v199
    %215 = vmatpush.bf16.msra.mxu0 %v198
    %216 = vmatpush.bf16.msra.mxu0 %v197
    %217 = vmatpush.bf16.msra.mxu0 %v196
    %218 = vmatpush.bf16.msra.mxu0 %v195
    %219 = vmatmul.bf16.gmra.mxu0 %v142
    %v220 = vpop.f32.mrf.mxu0
    %v221 = vadd.f32 %v161, %v220
    %v222 = vpop.f32.mrf.mxu0
    %223 = vdwg.mxu0
    %v224 = vtanh.pop %v221
    %v225 = vmul.f32 %v224, 5.0
    %vm226 = vcmask 64512
    %227 = vst.msk [vmem:[#allocation2] sm:$0xff] %vm226, %v225
    // Predicated region
    $region30: #{policy_network_forward.1} parent=1 // pred_check
      _
    $region31: #{policy_network_forward.1} parent=1 // pred_check_branch
      %229 = sbr.rel (0) target = $region33
    $region32: #{policy_network_forward.1} parent=1 // pred_region
      %231 = vsyncadd [#allocation3], 0
      %s233 = sshll.u32 [#allocation2], 4
      %s234 = int_to_ptr.vmem [resolvable:$true] %s233
      %s235 = sshll.u32 %s7, 4
      %s236 = int_to_ptr.hbm [resolvable:$true] %s235
      %238 = dma.vmem_to_hbm [thread:$0]  %s234, 128, %s236, [#allocation3]
    $region33: #{policy_network_forward.1} parent=1 // pred_fallthru
      _
    // Predicated region
    $region34: #{policy_network_forward.1} parent=1 // pred_check
      _
    $region35: #{policy_network_forward.1} parent=1 // pred_check_branch
      %240 = sbr.rel (0) target = $region37
    $region36: #{policy_network_forward.1} parent=1 // pred_region
      %242 = dma.done [#allocation3], 128
    $region37: #{policy_network_forward.1} parent=1 // pred_fallthru
      _
    %243 = vsyncpa [#allocation3], 1

</llo_original>
